<compile_context>
chip_gen: v7x
topology: tpu7x:2x2x1
jax: 0.10.0
libtpu: 0.0.40
codegen_flags: <defaults>
</compile_context>

<pallas_src>
import functools

import jax
import jax.numpy as jnp
from jax.experimental import pallas as pl
from jax.experimental.pallas import tpu as pltpu


# =====================  grouped / tiled linear (QKV & proj)  =====================

def _glinear_kernel(x_ref, w_ref, o_ref):
    o_ref[0] = jnp.dot(x_ref[...], w_ref[0],
                       preferred_element_type=jnp.float32).astype(o_ref.dtype)


def _glinear_bias_kernel(x_ref, w_ref, b_ref, o_ref):
    acc = jnp.dot(x_ref[...], w_ref[0], preferred_element_type=jnp.float32)
    o_ref[0] = (acc + b_ref[0].astype(jnp.float32)).astype(o_ref.dtype)


def grouped_linear_pallas(x2d, w, b=None, out_dtype=jnp.bfloat16):
    """out[g] = x2d @ w[g] (+ b[g]).  x2d: (M, Cin), w: (G, Cin, Cout).

    Group axis is innermost in the grid so the activation tile is DMA'd once
    per m-tile (not once per group); activations are streamed as bf16.
    """
    x2d = x2d.astype(jnp.bfloat16)
    M, Cin = x2d.shape
    G, _, Cout = w.shape
    tm = M if M <= 512 else 256
    tn = Cout if Cout <= 512 else 256
    grid = (pl.cdiv(M, tm), pl.cdiv(Cout, tn), G)        # g innermost: x reused
    in_specs = [pl.BlockSpec((tm, Cin), lambda m, n, g: (m, 0)),
                pl.BlockSpec((1, Cin, tn), lambda m, n, g: (g, 0, n))]
    args = [x2d, w]
    if b is not None:
        in_specs.append(pl.BlockSpec((1, 1, tn), lambda m, n, g: (g, 0, n)))
        args.append(b)
        kern = _glinear_bias_kernel
    else:
        kern = _glinear_kernel
    # TODO(synk): tile the contraction dim (Cin) with a VMEM accumulator for
    #             very large model dims; full-K blocks are fine at MViT scale.
    return pl.pallas_call(
        kern,
        out_shape=jax.ShapeDtypeStruct((G, M, Cout), out_dtype),
        grid=grid,
        in_specs=in_specs,
        out_specs=pl.BlockSpec((1, tm, tn), lambda m, n, g: (g, m, n)),
        compiler_params=pltpu.CompilerParams(
            dimension_semantics=("parallel", "parallel", "parallel")),
    )(*args)


# ============  fused attention-pool (depthwise conv3d) + LayerNorm  ============

def _pool_ln_kernel(tok_ref, w_ref, g_ref, b_ref, cls_ref, sp_ref, xpad_ref, *,
                    T, H, W, KT, KH, KW, st, sh, sw, To, Ho, Wo, nh, hd, eps):
    # tok_ref : (N, C) bf16      -- one batch element's tokens, cls at row 0
    # w_ref   : (KT, KH, KW, C)  -- per-channel conv filters (tiled over heads)
    # g_ref/b_ref : (1, C)       -- LayerNorm affine (tiled over heads)
    # cls_ref : (1, C)           -- cls-token output (LayerNorm only)
    # sp_ref  : (Ho*Wo, C)       -- one pooled temporal plane
    # xpad_ref: (KT, Hp, Wp, C) bf16 -- zero-padded halo slab for this plane
    f32 = jnp.float32
    C = nh * hd
    pt, ph, pw = KT // 2, KH // 2, KW // 2
    Hp, Wp = H + 2 * ph, W + 2 * pw
    to = pl.program_id(1)

    gam = g_ref[...].astype(f32)                         # (1, C)
    bet = b_ref[...].astype(f32)

    def group_ln(x):
        # per-head LayerNorm over hd-lane segments; one-pass stats, no masks.
        segs = []
        for h in range(nh):
            seg = x[:, h * hd:(h + 1) * hd]
            mu = jnp.mean(seg, axis=-1, keepdims=True)
            msq = jnp.mean(seg * seg, axis=-1, keepdims=True)
            var = msq - mu * mu
            segs.append((seg - mu) * jax.lax.rsqrt(var + eps))
        return jnp.concatenate(segs, axis=-1) * gam + bet

    # ---- cls token: LayerNorm only ----
    cls_ref[...] = group_ln(tok_ref[0:1, :].astype(f32)).astype(cls_ref.dtype)

    # ---- fill the (KT, Hp, Wp, C) slab for this output temporal plane ----
    # Only the H/W halo border is zeroed; the interior is fully overwritten.
    zrow = jnp.zeros((ph, Wp, C), xpad_ref.dtype) if ph > 0 else None
    zcol = jnp.zeros((H, pw, C), xpad_ref.dtype) if pw > 0 else None
    for kt in range(KT):
        if ph > 0:
            xpad_ref[kt, 0:ph, :, :] = zrow
            xpad_ref[kt, ph + H:Hp, :, :] = zrow
        if pw > 0:
            xpad_ref[kt, ph:ph + H, 0:pw, :] = zcol
            xpad_ref[kt, ph:ph + H, pw + W:Wp, :] = zcol

        t_in = to * st + (kt - pt)                       # temporal halo index
        valid = jnp.logical_and(t_in >= 0, t_in < T)

        @pl.when(valid)
        def _():
            base = 1 + t_in * (H * W)                    # +1 skips the cls row
            for hh in range(H):
                xpad_ref[kt, ph + hh, pw:pw + W, :] = (
                    tok_ref[pl.ds(base + hh * W, W), :].astype(xpad_ref.dtype))

        @pl.when(jnp.logical_not(valid))
        def _():
            xpad_ref[kt, ph:ph + H, pw:pw + W, :] = jnp.zeros(
                (H, W, C), xpad_ref.dtype)

    # ---- hoisted bf16 weight taps (KT*KH*KW loads once, not per output row) ----
    taps = [[[w_ref[kt, kh, kw:kw + 1, :].astype(jnp.bfloat16)
              for kw in range(KW)] for kh in range(KH)] for kt in range(KT)]

    # ---- strided depthwise conv over ALL heads + fused LayerNorm ----
    # bf16 multiplies (v6e/v7x VALU; keep f32 on v5e if needed), f32 accumulate,
    # one contiguous (Wp, C) load per (kt, kh), in-register strided kw taps,
    # single lane/sublane-dense store for the whole (Ho*Wo, C) plane.
    # TODO(synk): for production Ho (e.g. 56) move `ho` onto a grid axis or a
    #             lax.fori_loop with per-row stores instead of a full unroll.
    rows = []
    for ho in range(Ho):
        acc = jnp.zeros((Wo, C), f32)
        for kt in range(KT):
            for kh in range(KH):
                row = xpad_ref[kt, ho * sh + kh, :, :]           # (Wp, C) bf16
                for kw in range(KW):
                    patch = row[kw:kw + (Wo - 1) * sw + 1:sw, :]  # strided tap
                    acc = acc + (patch * taps[kt][kh][kw]).astype(f32)
        rows.append(group_ln(acc))
    sp_ref[...] = jnp.concatenate(rows, axis=0).astype(sp_ref.dtype)


def pool_ln_pallas(qkv, which, conv_w, gamma, beta, thw_shape, kernel, stride,
                   *, nh, hd, eps=1e-5, out_dtype=jnp.bfloat16):
    """Fused attention_pool(conv, norm=LayerNorm) for one of q/k/v.

    qkv: (3, B, N, C) with N = 1 + T*H*W (cls token at row 0).
    Returns ((B, 1 + To*Ho*Wo, C), [To, Ho, Wo]).
    """
    _, B, N, C = qkv.shape
    T, H, W = thw_shape
    KT, KH, KW = kernel
    st, sh, sw = stride
    pt, ph, pw = KT // 2, KH // 2, KW // 2
    To = (T + 2 * pt - KT) // st + 1
    Ho = (H + 2 * ph - KH) // sh + 1
    Wo = (W + 2 * pw - KW) // sw + 1
    Lout = To * Ho * Wo
    Hp, Wp = H + 2 * ph, W + 2 * pw

    kern = functools.partial(
        _pool_ln_kernel, T=T, H=H, W=W, KT=KT, KH=KH, KW=KW,
        st=st, sh=sh, sw=sw, To=To, Ho=Ho, Wo=Wo, nh=nh, hd=hd, eps=eps)

    # TODO(synk): at production T*H*W also tile the token *input* reads
    #             (memory_space=pl.ANY + manual per-slab DMA) instead of
    #             keeping the full (N, C) token block resident per batch.
    cls_out, sp_out = pl.pallas_call(
        kern,
        out_shape=(jax.ShapeDtypeStruct((B, 1, C), out_dtype),
                   jax.ShapeDtypeStruct((B, To, Ho * Wo, C), out_dtype)),
        grid=(B, To),
        in_specs=[
            pl.BlockSpec((None, None, N, C), lambda b, t: (which, b, 0, 0)),
            pl.BlockSpec((KT, KH, KW, C), lambda b, t: (0, 0, 0, 0)),
            pl.BlockSpec((1, C), lambda b, t: (0, 0)),
            pl.BlockSpec((1, C), lambda b, t: (0, 0)),
        ],
        out_specs=(pl.BlockSpec((None, 1, C), lambda b, t: (b, 0, 0)),
                   pl.BlockSpec((None, None, Ho * Wo, C), lambda b, t: (b, t, 0, 0))),
        scratch_shapes=[pltpu.VMEM((KT, Hp, Wp, C), jnp.bfloat16)],
        compiler_params=pltpu.CompilerParams(
            dimension_semantics=("parallel", "arbitrary")),
    )(qkv, conv_w, gamma, beta)

    # TODO(synk): this cls/spatial concat could be fused by passing the cls
    #             rows to the attention kernel as a separate tiny input.
    pooled = jnp.concatenate([cls_out, sp_out.reshape(B, Lout, C)], axis=1)
    return pooled, [To, Ho, Wo]


# ===========  flash-style attention (batch x q-tile x kv-tile grid)  ===========

def _attn_kernel(q_ref, k_ref, v_ref, o_ref, m_sc, l_sc, acc_sc, *,
                 nh, hd, scale, nk_total, tk):
    ki = pl.program_id(2)

    @pl.when(ki == 0)
    def _():
        m_sc[...] = jnp.full(m_sc.shape, -jnp.inf, m_sc.dtype)
        l_sc[...] = jnp.zeros(l_sc.shape, l_sc.dtype)
        acc_sc[...] = jnp.zeros(acc_sc.shape, acc_sc.dtype)

    q = q_ref[0]                                         # (tq, C) bf16
    k = k_ref[0]                                         # (tk, C)
    v = v_ref[0]

    # mask for a ragged last kv tile (no-op when tiles divide evenly)
    col_ok = (ki * tk + jax.lax.broadcasted_iota(jnp.int32, (1, tk), 1)) < nk_total

    for h in range(nh):
        lo = h * hd
        qh = q[:, lo:lo + hd]
        if scale != 1.0:   # identity-pool path only; pooled path folds scale into norm_q
            qh = (qh.astype(jnp.float32) * scale).astype(jnp.bfloat16)
        kh = k[:, lo:lo + hd]
        vh = v[:, lo:lo + hd]
        s = jax.lax.dot_general(qh, kh, (((1,), (1,)), ((), ())),
                                preferred_element_type=jnp.float32)   # (tq, tk)
        s = jnp.where(col_ok, s, -1e30)
        m_prev = m_sc[:, h:h + 1]
        m_new = jnp.maximum(m_prev, jnp.max(s, axis=-1, keepdims=True))
        alpha = jnp.exp(m_prev - m_new)
        p = jnp.exp(s - m_new)
        l_sc[:, h:h + 1] = alpha * l_sc[:, h:h + 1] + jnp.sum(p, axis=-1, keepdims=True)
        acc_sc[:, lo:lo + hd] = alpha * acc_sc[:, lo:lo + hd] + jnp.dot(
            p.astype(jnp.bfloat16), vh, preferred_element_type=jnp.float32)
        m_sc[:, h:h + 1] = m_new

    @pl.when(ki == pl.num_programs(2) - 1)
    def _():
        segs = []
        for h in range(nh):
            lo = h * hd
            segs.append(acc_sc[:, lo:lo + hd] / l_sc[:, h:h + 1])
        # single lane-dense (tq, C) output store
        o_ref[0] = jnp.concatenate(segs, axis=-1).astype(o_ref.dtype)


def attention_pallas(q, k, v, *, nh, hd, scale, out_dtype=jnp.bfloat16):
    B, Nq, C = q.shape
    Nk = k.shape[1]
    tq = Nq if Nq <= 512 else 256         # full block or multiple of 8
    tk = Nk if Nk <= 1024 else 512
    kern = functools.partial(_attn_kernel, nh=nh, hd=hd, scale=scale,
                             nk_total=Nk, tk=tk)
    return pl.pallas_call(
        kern,
        out_shape=jax.ShapeDtypeStruct((B, Nq, C), out_dtype),
        grid=(B, pl.cdiv(Nq, tq), pl.cdiv(Nk, tk)),
        in_specs=[pl.BlockSpec((1, tq, C), lambda b, qi, ki: (b, qi, 0)),
                  pl.BlockSpec((1, tk, C), lambda b, qi, ki: (b, ki, 0)),
                  pl.BlockSpec((1, tk, C), lambda b, qi, ki: (b, ki, 0))],
        out_specs=pl.BlockSpec((1, tq, C), lambda b, qi, ki: (b, qi, 0)),
        scratch_shapes=[pltpu.VMEM((tq, nh), jnp.float32),
                        pltpu.VMEM((tq, nh), jnp.float32),
                        pltpu.VMEM((tq, C), jnp.float32)],
        compiler_params=pltpu.CompilerParams(
            dimension_semantics=("parallel", "parallel", "arbitrary")),
    )(q, k, v)


# =====================  forward pass (thin JAX glue)  =====================

def multi_scale_attention_forward(x, thw_shape, params, *, num_heads,
                                  kernel_q, kernel_kv, stride_q, stride_kv,
                                  has_cls_embed=True):
    # TODO(synk): pool_first=True branch not implemented (references undefined
    #             self.q/self.k/self.v in the original module); drop_rate=0 -> no dropout.
    if not has_cls_embed:
        # TODO(synk): has_cls_embed=False token layout not implemented.
        raise NotImplementedError("only has_cls_embed=True is supported")
    B, N, C = x.shape
    hd = C // num_heads
    scale = hd ** (-0.5)

    # QKV projection, written directly in (3, B, N, C) layout (bf16).
    qkv = grouped_linear_pallas(x.reshape(B * N, C), params["qkv_w"], None,
                                out_dtype=jnp.bfloat16)
    qkv = qkv.reshape(3, B, N, C)

    def is_identity(kernel, stride):
        return all(kk == 1 for kk in kernel) and all(ss == 1 for ss in stride)

    # Fold 1/sqrt(head_dim) into norm_q's affine when q goes through the
    # pool+LN path (zero kernel cost); keep it in the attention kernel otherwise.
    if is_identity(kernel_q, stride_q):
        norm_q_g, norm_q_b, attn_scale = params["norm_q_g"], params["norm_q_b"], scale
    else:
        norm_q_g = params["norm_q_g"] * scale
        norm_q_b = params["norm_q_b"] * scale
        attn_scale = 1.0

    def pool(which, kernel, stride, conv_w, gamma, beta):
        if is_identity(kernel, stride):
            # pool is None in the PyTorch module: identity, no norm.
            return qkv[which], list(thw_shape)
        return pool_ln_pallas(qkv, which, conv_w, gamma, beta,
                              thw_shape, kernel, stride, nh=num_heads, hd=hd)

    q, out_shape = pool(0, kernel_q, stride_q, params["pool_q_w"], norm_q_g, norm_q_b)
    k, _ = pool(1, kernel_kv, stride_kv, params["pool_k_w"],
                params["norm_k_g"], params["norm_k_b"])
    v, _ = pool(2, kernel_kv, stride_kv, params["pool_v_w"],
                params["norm_v_g"], params["norm_v_b"])

    o = attention_pallas(q, k, v, nh=num_heads, hd=hd, scale=attn_scale)
    Nq = o.shape[1]
    o = grouped_linear_pallas(o.reshape(B * Nq, C), params["proj_w"],
                              params["proj_b"], out_dtype=jnp.float32)
    return o.reshape(B, Nq, C), out_shape


def init_params(key, dim, num_heads, kernel_q, kernel_kv):
    hd = dim // num_heads
    ks = jax.random.split(key, 5)
    p = {}
    # matmul weights kept in bf16 (f32 accumulation inside the kernels)
    p["qkv_w"] = (0.02 * jax.random.normal(ks[0], (3, dim, dim), jnp.float32)
                  ).astype(jnp.bfloat16)                  # qkv_bias=False
    p["proj_w"] = (0.02 * jax.random.normal(ks[1], (1, dim, dim), jnp.float32)
                   ).astype(jnp.bfloat16)
    p["proj_b"] = jnp.zeros((1, 1, dim), jnp.float32)

    # Depthwise Conv3d filters: per-channel (head_dim) filters shared across
    # heads, stored channels-last and tiled over heads to the full model dim.
    def dw(k_, kern):
        w_hd = 0.1 * jax.random.normal(k_, (*kern, hd), jnp.float32)
        return jnp.tile(w_hd, (1, 1, 1, num_heads))
    p["pool_q_w"] = dw(ks[2], kernel_q)
    p["pool_k_w"] = dw(ks[3], kernel_kv)
    p["pool_v_w"] = dw(ks[4], kernel_kv)

    # LayerNorm(head_dim) affine params, tiled over heads (shared weights).
    for name in ("q", "k", "v"):
        p[f"norm_{name}_g"] = jnp.ones((1, dim), jnp.float32)
        p[f"norm_{name}_b"] = jnp.zeros((1, dim), jnp.float32)
    return p


if __name__ == "__main__":
    key = jax.random.PRNGKey(0)
    B, T, H, W = 2, 2, 4, 4
    dim, num_heads = 32, 4
    kernel_q, stride_q = (3, 3, 3), (1, 1, 1)
    kernel_kv, stride_kv = (3, 3, 3), (1, 2, 2)
    N = T * H * W + 1                                     # +1 cls token

    kx, kp = jax.random.split(key)
    x = jax.random.normal(kx, (B, N, dim), jnp.float32)
    params = init_params(kp, dim, num_heads, kernel_q, kernel_kv)

    out, out_shape = multi_scale_attention_forward(
        x, [T, H, W], params, num_heads=num_heads,
        kernel_q=kernel_q, kernel_kv=kernel_kv,
        stride_q=stride_q, stride_kv=stride_kv, has_cls_embed=True)
    out = jax.block_until_ready(out)

    assert out.shape == (B, N, dim), out.shape
    assert out_shape == [T, H, W], out_shape
    print("KERNEL_OK")
</pallas_src>

<mosaic_0001>
module attributes {stable_mosaic.version = 11 : i64} {
  func.func @_glinear_kernel(%arg0: i32, %arg1: i32, %arg2: i32, %arg3: memref<66x32xbf16, #tpu.memory_space<vmem>>, %arg4: memref<1x32x32xbf16, #tpu.memory_space<vmem>>, %arg5: memref<1x66x32xbf16, #tpu.memory_space<vmem>>) attributes {dimension_semantics = [#tpu.dimension_semantics<parallel>, #tpu.dimension_semantics<parallel>, #tpu.dimension_semantics<parallel>], iteration_bounds = array<i64: 1, 1, 3>, scalar_prefetch = 0 : i64, scratch_operands = 0 : i64, tpu.core_type = #tpu.core_type<tc>, window_params = [{transform_indices = @transform_0, window_bounds = array<i64: 66, 32>}, {transform_indices = @transform_1, window_bounds = array<i64: 1, 32, 32>}, {transform_indices = @transform_2, window_bounds = array<i64: 1, 66, 32>}]} {
    %c0 = arith.constant 0 : index
    %c0_0 = arith.constant 0 : index
    %0 = vector.load %arg3[%c0, %c0_0] : memref<66x32xbf16, #tpu.memory_space<vmem>>, vector<66x32xbf16>
    %c0_1 = arith.constant 0 : index
    %c0_2 = arith.constant 0 : index
    %c0_3 = arith.constant 0 : index
    %1 = vector.load %arg4[%c0_1, %c0_2, %c0_3] : memref<1x32x32xbf16, #tpu.memory_space<vmem>>, vector<1x32x32xbf16>
    %2 = vector.shape_cast %1 : vector<1x32x32xbf16> to vector<32x32xbf16>
    %cst = arith.constant dense<0.000000e+00> : vector<66x32xf32>
    %3 = tpu.matmul %0, %2, %cst {dimension_numbers = #tpu.dot_dimension_numbers<[1], [0], [0], [1], [0, 0, 1, 1], [], []>} : vector<66x32xbf16>, vector<32x32xbf16>, vector<66x32xf32> -> vector<66x32xf32>
    %4 = arith.truncf %3 : vector<66x32xf32> to vector<66x32xbf16>
    %c0_4 = arith.constant 0 : index
    %c0_5 = arith.constant 0 : index
    %c0_6 = arith.constant 0 : index
    %5 = vector.load %arg5[%c0_4, %c0_5, %c0_6] : memref<1x66x32xbf16, #tpu.memory_space<vmem>>, vector<1x66x32xbf16>
    %6 = vector.shape_cast %5 : vector<1x66x32xbf16> to vector<66x32xbf16>
    %7 = vector.shape_cast %4 : vector<66x32xbf16> to vector<1x66x32xbf16>
    tpu.vector_store %arg5[%c0_4, %c0_5, %c0_6], %7 {strides = array<i32>} : memref<1x66x32xbf16, #tpu.memory_space<vmem>>, vector<1x66x32xbf16>,
    return
  }
  func.func @transform_0(%arg0: i32, %arg1: i32, %arg2: i32) -> (i32, i32) {
    %c0_i32 = arith.constant 0 : i32
    %c0_i32_0 = arith.constant 0 : i32
    return %arg0, %c0_i32 : i32, i32
  }
  func.func @transform_1(%arg0: i32, %arg1: i32, %arg2: i32) -> (i32, i32, i32) {
    %c0_i32 = arith.constant 0 : i32
    %c0_i32_0 = arith.constant 0 : i32
    return %arg2, %c0_i32, %arg1 : i32, i32, i32
  }
  func.func @transform_2(%arg0: i32, %arg1: i32, %arg2: i32) -> (i32, i32, i32) {
    %c0_i32 = arith.constant 0 : i32
    return %arg2, %arg0, %arg1 : i32, i32, i32
  }
}

</mosaic_0001>

<llo_original>
// kernel: tpu_custom_call.1
$region0: #{tpu_custom_call.1}
  #allocation0 [shape = 'u32[]', space=smem, size = 0x4, offset = 0x4, fixed_abs, tag = 'smem constant byte address 0x4 - core index']
  #allocation1 [shape = 'u32[144,128]{1,0:T(1,128)}', space=vmem, size = 0x12000, scoped, tag = 'internal scratch']
  %s0 = inlined_call_operand.vmem [shape: bf16[66,32], index: 0, kind: input, shape index: {}]
  %s1 = inlined_call_operand.vmem [shape: bf16[3,32,32], index: 1, kind: input, shape index: {}]
  %s2 = inlined_call_operand.vmem [shape: bf16[3,66,32], index: 2, kind: output, shape index: {}]
  %s3 = sld [smem:[#allocation0]]
  $region41: #{tpu_custom_call.1} parent=0
    _
  %s5 = ssub.s32 1, %s3
  %s6 = scalar_select 0, %s5, %s3
  loop: start=0, step=1, limit=5
  $region2: #{tpu_custom_call.1} parent=0 // loop_pre_header
    _
  $region3: #{tpu_custom_call.1} parent=0 // loop_header
    %s8 = sphi 0, %s12
    %p9 = scmp.ge.s32.totalorder %s8, 5
    %s15 = sphi 0, %s34
    %s16 = sphi 0, %s30
    %s17 = sphi 0, %s26
    %s18 = sphi 0, %s15
    %s19 = sphi 0, %s16
    %s20 = sphi 0, %s17
    %s21 = sphi 0, %s18
    %s22 = sphi 0, %s19
    %s23 = sphi 0, %s20
    %s37 = sphi 0, %s39
    %s40 = sphi 0, %s37
    %s41 = sphi 0, %s40
    %s57 = sphi 0, %s41
    %s65 = sphi 0, %s67
    %s68 = sphi 0, %s65
    %s69 = sphi 0, %s68
    %s85 = sphi 0, %s69
    %s95 = sphi 0, %s97
    %s98 = sphi 0, %s95
    %s99 = sphi 0, %s98
    %s115 = sphi 0, %s99
  $region4: #{tpu_custom_call.1} parent=0 // loop_header_branch
    %11 = sbr.rel (%p9) target = $region8
  $region5: #{tpu_custom_call.1} parent=0 // loop_body
    %s13 = ssub.s32 %s8, 1
    %s14 = ssub.s32 %s8, 2
    %s24 = sadd.s32 1, %s17
    %p25 = scmp.ge.s32.totalorder %s24, 3
    %s26 = scalar_select %p25, 0, %s24
    %s27 = sadd.s32 1, %s16
    %s28 = scalar_select %p25, %s27, %s16
    %p29 = scmp.ge.s32.totalorder %s28, 1
    %s30 = scalar_select %p29, 0, %s28
    %s31 = sadd.s32 1, %s15
    %s32 = scalar_select %p29, %s31, %s15
    %p33 = scmp.ge.s32.totalorder %s32, 1
    %s34 = scalar_select %p33, 0, %s32
    %s35 = ssub.s32 %s15, %s34
    %p36 = scmp.eq.s32.totalorder %s35, 0
    %s38 = sadd.s32 %s37, 1
    %s39 = scalar_select %p36, %s37, %s38
    %p42 = pneg %p36
    %p43 = scmp.eq.s32.totalorder %s8, 2
    %p44 = por %p42, %p43
    %p45 = scmp.ne.s32.totalorder %s37, %s40
    %p46 = scmp.eq.s32.totalorder %s8, 0
    %p47 = por %p45, %p46
    %p48 = scmp.ne.s32.totalorder %s37, %s40
    %p49 = scmp.eq.s32.totalorder %s13, 2
    %p50 = por %p48, %p49
    %p51 = scmp.ne.s32.totalorder %s40, %s41
    %p52 = scmp.eq.s32.totalorder %s13, 0
    %p53 = por %p51, %p52
    %p54 = scmp.ne.s32.totalorder %s40, %s41
    %p55 = scmp.eq.s32.totalorder %s14, 2
    %p56 = por %p54, %p55
    %p58 = scmp.ne.s32.totalorder %s41, %s57
    %p59 = scmp.eq.s32.totalorder %s14, 0
    %p60 = por %p58, %p59
    %s61 = ssub.s32 %s17, %s26
    %s62 = ssub.s32 %s16, %s30
    %s63 = sor.u32 %s61, %s62
    %p64 = scmp.eq.s32.totalorder %s63, 0
    %s66 = sadd.s32 %s65, 1
    %s67 = scalar_select %p64, %s65, %s66
    %p70 = pneg %p64
    %p71 = scmp.eq.s32.totalorder %s8, 2
    %p72 = por %p70, %p71
    %p73 = scmp.ne.s32.totalorder %s65, %s68
    %p74 = scmp.eq.s32.totalorder %s8, 0
    %p75 = por %p73, %p74
    %p76 = scmp.ne.s32.totalorder %s65, %s68
    %p77 = scmp.eq.s32.totalorder %s13, 2
    %p78 = por %p76, %p77
    %p79 = scmp.ne.s32.totalorder %s68, %s69
    %p80 = scmp.eq.s32.totalorder %s13, 0
    %p81 = por %p79, %p80
    %p82 = scmp.ne.s32.totalorder %s68, %s69
    %p83 = scmp.eq.s32.totalorder %s14, 2
    %p84 = por %p82, %p83
    %p86 = scmp.ne.s32.totalorder %s69, %s85
    %p87 = scmp.eq.s32.totalorder %s14, 0
    %p88 = por %p86, %p87
    %s89 = ssub.s32 %s17, %s26
    %s90 = ssub.s32 %s15, %s34
    %s91 = sor.u32 %s89, %s90
    %s92 = ssub.s32 %s16, %s30
    %s93 = sor.u32 %s91, %s92
    %p94 = scmp.eq.s32.totalorder %s93, 0
    %s96 = sadd.s32 %s95, 1
    %s97 = scalar_select %p94, %s95, %s96
    %p100 = pneg %p94
    %p101 = scmp.eq.s32.totalorder %s8, 2
    %p102 = por %p100, %p101
    %p103 = scmp.ne.s32.totalorder %s95, %s98
    %p104 = scmp.eq.s32.totalorder %s8, 0
    %p105 = por %p103, %p104
    %p106 = scmp.ne.s32.totalorder %s95, %s98
    %p107 = scmp.eq.s32.totalorder %s13, 2
    %p108 = por %p106, %p107
    %p109 = scmp.ne.s32.totalorder %s98, %s99
    %p110 = scmp.eq.s32.totalorder %s13, 0
    %p111 = por %p109, %p110
    %p112 = scmp.ne.s32.totalorder %s98, %s99
    %p113 = scmp.eq.s32.totalorder %s14, 2
    %p114 = por %p112, %p113
    %p116 = scmp.ne.s32.totalorder %s99, %s115
    %p117 = scmp.eq.s32.totalorder %s14, 0
    %p118 = por %p116, %p117
    %p119 = scmp.le.s32.totalorder 1, %s8
    %p120 = scmp.lt.s32.totalorder %s8, 4
    %p121 = pnand %p119, %p120
    %p122 = pneg %p121
    // Predicated region
    $region9: #{tpu_custom_call.1} parent=5 // pred_check
      _
    $region10: #{tpu_custom_call.1} parent=5 // pred_check_branch
      %124 = sbr.rel (%p121) target = $region12
    $region11: #{tpu_custom_call.1} parent=5 // pred_region
      %s125 = ssub.s32 %s8, 1
      // Predicated region
      $region13: #{tpu_custom_call.1} parent=11 // pred_check
        %p126 = pneg %p53
      $region14: #{tpu_custom_call.1} parent=11 // pred_check_branch
        %128 = sbr.rel (%p126) target = $region16
      $region15: #{tpu_custom_call.1} parent=11 // pred_region
        %s129 = smul.u32 9, %s18
        %p130 = scmp.lt.s32.totalorder %s129, 8
        %s131 = scalar_select %p130, %s129, 8
        %s132 = smul.addr %s131, 4
        %s133 = scalar_lea.vmem %s0, %s132
        %s134 = smul.u32 9, %s18
      $region16: #{tpu_custom_call.1} parent=11 // pred_fallthru
        _
    $region12: #{tpu_custom_call.1} parent=5 // pred_fallthru
      _
    %p135 = scmp.lt.s32.totalorder %s8, 3
    // Predicated region
    $region17: #{tpu_custom_call.1} parent=5 // pred_check
      %p136 = pneg %p135
    $region18: #{tpu_custom_call.1} parent=5 // pred_check_branch
      %138 = sbr.rel (%p136) target = $region20
    $region19: #{tpu_custom_call.1} parent=5 // pred_region
      // Predicated region
      $region21: #{tpu_custom_call.1} parent=19 // pred_check
        %p139 = pneg %p75
      $region22: #{tpu_custom_call.1} parent=19 // pred_check_branch
        %141 = sbr.rel (%p139) target = $region24
      $region23: #{tpu_custom_call.1} parent=19 // pred_region
        %p142 = scmp.lt.s32.totalorder %s17, 2
        %s143 = scalar_select %p142, %s17, 2
        %p144 = scmp.lt.s32.totalorder %s16, 0
        %s145 = scalar_select %p144, %s16, 0
        %s146 = smul.addr %s143, 4
        %s147 = sadd.s32 %s145, %s146
        %s148 = smul.addr %s147, 4
        %s149 = scalar_lea.vmem %s1, %s148
      $region24: #{tpu_custom_call.1} parent=19 // pred_fallthru
        _
    $region20: #{tpu_custom_call.1} parent=5 // pred_fallthru
      _
    %p150 = scmp.le.s32.totalorder 1, %s8
    %p151 = scmp.lt.s32.totalorder %s8, 4
    %p152 = pnand %p150, %p151
    %p153 = pneg %p152
    // Predicated region
    $region25: #{tpu_custom_call.1} parent=5 // pred_check
      _
    $region26: #{tpu_custom_call.1} parent=5 // pred_check_branch
      %155 = sbr.rel (%p152) target = $region28
    $region27: #{tpu_custom_call.1} parent=5 // pred_region
      %s156 = ssub.s32 %s8, 1
      %s157 = smul.u32 9, %s18
      %p158 = scmp.lt.s32.totalorder %s157, 8
      %s159 = scalar_select %p158, %s157, 8
      %s160 = smul.addr %s159, 4
      %s161 = scalar_lea.vmem %s0, %s160
      %p162 = pneg %p53
      %p163 = pneg %p50
      %p164 = scmp.lt.s32.totalorder %s20, 2
      %s165 = scalar_select %p164, %s20, 2
      %p166 = scmp.lt.s32.totalorder %s19, 0
      %s167 = scalar_select %p166, %s19, 0
      %s168 = smul.addr %s165, 4
      %s169 = sadd.s32 %s167, %s168
      %s170 = smul.addr %s169, 4
      %s171 = scalar_lea.vmem %s1, %s170
      %p172 = pneg %p81
      %p173 = pneg %p78
      %p174 = pneg %p111
      %p175 = pneg %p108
      %s176 = smul.u32 9, %s18
      %p177 = scmp.lt.s32.totalorder %s20, 2
      %s178 = scalar_select %p177, %s20, 2
      %p179 = scmp.lt.s32.totalorder %s176, 8
      %s180 = scalar_select %p179, %s176, 8
      %p181 = scmp.lt.s32.totalorder %s19, 0
      %s182 = scalar_select %p181, %s19, 0
      %s183 = sadd.s32 %s182, %s180
      %s184 = smul.addr %s178, 9
      %s185 = sadd.s32 %s183, %s184
      %s186 = smul.addr %s185, 4
      %s187 = scalar_lea.vmem %s2, %s186
      %s188 = smul.u32 9, %s18
      %p189 = scmp.lt.s32.totalorder %s188, 8
      %s190 = scalar_select %p189, %s188, 8
      %s191 = smul.addr %s190, 4
      %s192 = scalar_lea.vmem %s0, %s191
      %s193 = smul.u32 9, %s18
      %p194 = scmp.lt.s32.totalorder %s20, 2
      %s195 = scalar_select %p194, %s20, 2
      %p196 = scmp.lt.s32.totalorder %s19, 0
      %s197 = scalar_select %p196, %s19, 0
      %s198 = smul.addr %s195, 4
      %s199 = sadd.s32 %s197, %s198
      %s200 = smul.addr %s199, 4
      %s201 = scalar_lea.vmem %s1, %s200
      %s202 = smul.u32 9, %s18
      %p203 = scmp.lt.s32.totalorder %s20, 2
      %s204 = scalar_select %p203, %s20, 2
      %p205 = scmp.lt.s32.totalorder %s202, 8
      %s206 = scalar_select %p205, %s202, 8
      %p207 = scmp.lt.s32.totalorder %s19, 0
      %s208 = scalar_select %p207, %s19, 0
      %s209 = sadd.s32 %s208, %s206
      %s210 = smul.addr %s204, 9
      %s211 = sadd.s32 %s209, %s210
      %s212 = smul.addr %s211, 4
      %s213 = scalar_lea.vmem %s2, %s212
      %s214 = smul.u32 9, %s18
      %v216 = vld [vmem:[%s192] sm:$0xf]
      %v217 = vld [vmem:[%s192 + $0x4] sm:$0xf]
      %v218 = vld [vmem:[%s192 + $0x8] sm:$0xf]
      %v219 = vld [vmem:[%s192 + $0xc] sm:$0xf]
      %v220 = vld [vmem:[%s192 + $0x10] sm:$0xf]
      %v221 = vld [vmem:[%s192 + $0x14] sm:$0xf]
      %v222 = vld [vmem:[%s192 + $0x18] sm:$0xf]
      %v223 = vld [vmem:[%s192 + $0x1c] sm:$0xf]
      %v224 = vld [vmem:[%s192 + $0x20] sm:$0x1]
      %v225 = vld [vmem:[%s201] sm:$0xf]
      %v226 = vld [vmem:[%s201 + $0x4] sm:$0xf]
      %v227 = vld [vmem:[%s201 + $0x8] sm:$0xf]
      %v228 = vld [vmem:[%s201 + $0xc] sm:$0xf]
      %v238 = vunpack.c.l.b16 %v216
      %v239 = vunpack.c.l.b16 %v217
      %v240 = vunpack.c.l.b16 %v218
      %v241 = vunpack.c.l.b16 %v219
      %v242 = vunpack.c.l.b16 %v220
      %v243 = vunpack.c.l.b16 %v221
      %v244 = vunpack.c.l.b16 %v222
      %v245 = vunpack.c.l.b16 %v223
      %v246 = vunpack.c.l.b16 %v224
      %v247 = vpack.c.b16 %v239, %v238
      %v248 = vpack.c.b16 %v241, %v240
      %v249 = vpack.c.b16 %v243, %v242
      %v250 = vpack.c.b16 %v245, %v244
      %v251 = vpack.c.b16 %v246, %v246
      %v256 = vunpack.c.l.b16 %v225
      %v257 = vunpack.c.l.b16 %v226
      %v258 = vunpack.c.l.b16 %v227
      %v259 = vunpack.c.l.b16 %v228
      %v260 = vpack.c.b16 %v257, %v256
      %v261 = vpack.c.b16 %v259, %v258
      %vm264 = vcmask 261120
      %v266 = vsel %vm264, %v247, 0
      %v269 = vsel %vm264, %v248, 0
      %v272 = vsel %vm264, %v249, 0
      %v275 = vsel %vm264, %v250, 0
      %v278 = vsel %vm264, %v251, 0
      %280 = vmatprep.subr.bf16.mxu0 0
      %281 = vmatpush1.bf16.msra.mxu0 %v260
      %282 = vmatprep.subr.bf16.mxu0 0
      %283 = vmatpush1.bf16.msra.mxu0 %v261
      %284 = vmatprep.subr.bf16.mxu0 0
      %285 = vmatpush1.bf16.msra.mxu0 0
      %286 = vmatprep.subr.bf16.mxu0 0
      %287 = vmatpush1.bf16.msra.mxu0 0
      %288 = vmatprep.subr.bf16.mxu0 0
      %289 = vmatpush1.bf16.msra.mxu0 0
      %290 = vmatprep.subr.bf16.mxu0 0
      %291 = vmatpush1.bf16.msra.mxu0 0
      %292 = vmatprep.subr.bf16.mxu0 0
      %293 = vmatpush1.bf16.msra.mxu0 0
      %294 = vmatprep.subr.bf16.mxu0 0
      %295 = vmatpush1.bf16.msra.mxu0 0
      %296 = vmatprep.subr.bf16.mxu0 0
      %297 = vmatpush1.bf16.msra.mxu0 0
      %298 = vmatprep.subr.bf16.mxu0 0
      %299 = vmatpush1.bf16.msra.mxu0 0
      %300 = vmatprep.subr.bf16.mxu0 0
      %301 = vmatpush1.bf16.msra.mxu0 0
      %302 = vmatprep.subr.bf16.mxu0 0
      %303 = vmatpush1.bf16.msra.mxu0 0
      %304 = vmatprep.subr.bf16.mxu0 0
      %305 = vmatpush1.bf16.msra.mxu0 0
      %306 = vmatprep.subr.bf16.mxu0 0
      %307 = vmatpush1.bf16.msra.mxu0 0
      %308 = vmatprep.subr.bf16.mxu0 0
      %309 = vmatpush1.bf16.msra.mxu0 0
      %310 = vmatprep.subr.bf16.mxu0 0
      %311 = vmatpush1.bf16.msra.mxu0 0
      %312 = vmatprep.mubr.bf16.mxu0 0
      %313 = vmatmul.mubr.bf16.gmra.mrb[0].mxu0 %v266
      %v314 = vpop.f32.mrb[0].mxu0
      %v315 = vadd.f32 0.0, %v314
      %v316 = vpop.f32.mrb[0].mxu0
      %v317 = vpop.f32.mrb[0].mxu0
      %v318 = vadd.f32 0.0, %v317
      %v319 = vpop.f32.mrb[0].mxu0
      %320 = vmatprep.mubr.bf16.mxu0 0
      %321 = vmatmul.mubr.bf16.gmra.mrb[0].mxu0 %v269
      %v322 = vpop.f32.mrb[0].mxu0
      %v323 = vadd.f32 0.0, %v322
      %v324 = vpop.f32.mrb[0].mxu0
      %v325 = vpop.f32.mrb[0].mxu0
      %v326 = vadd.f32 0.0, %v325
      %v327 = vpop.f32.mrb[0].mxu0
      %328 = vmatprep.mubr.bf16.mxu0 0
      %329 = vmatmul.mubr.bf16.gmra.mrb[0].mxu0 %v272
      %v330 = vpop.f32.mrb[0].mxu0
      %v331 = vadd.f32 0.0, %v330
      %v332 = vpop.f32.mrb[0].mxu0
      %v333 = vpop.f32.mrb[0].mxu0
      %v334 = vadd.f32 0.0, %v333
      %v335 = vpop.f32.mrb[0].mxu0
      %336 = vmatprep.mubr.bf16.mxu0 0
      %337 = vmatmul.mubr.bf16.gmra.mrb[0].mxu0 %v275
      %v338 = vpop.f32.mrb[0].mxu0
      %v339 = vadd.f32 0.0, %v338
      %v340 = vpop.f32.mrb[0].mxu0
      %v341 = vpop.f32.mrb[0].mxu0
      %v342 = vadd.f32 0.0, %v341
      %v343 = vpop.f32.mrb[0].mxu0
      %344 = vmatprep.mubr.bf16.mxu0 0
      %345 = vmatmul.mubr.bf16.gmra.mrb[0].mxu0 %v278
      %v346 = vpop.f32.mrb[0].mxu0
      %v347 = vadd.f32 0.0, %v346
      %v348 = vpop.f32.mrb[0].mxu0
      %v349 = vpop.f32.mrb[0].mxu0
      %v350 = vpop.f32.mrb[0].mxu0
      %351 = vdwg.mxu0
      %v352 = vpack.c.bf16 %v318, %v315
      %v353 = vpack.c.bf16 %v326, %v323
      %v354 = vpack.c.bf16 %v334, %v331
      %v355 = vpack.c.bf16 %v342, %v339
      %v356 = vpack.c.bf16 %v347, %v347
      %v362 = vunpack.c.l.b16 %v352
      %v363 = vunpack.c.h.b16 %v352
      %v364 = vunpack.c.l.b16 %v353
      %v365 = vunpack.c.h.b16 %v353
      %v366 = vunpack.c.l.b16 %v354
      %v367 = vunpack.c.h.b16 %v354
      %v368 = vunpack.c.l.b16 %v355
      %v369 = vunpack.c.h.b16 %v355
      %v370 = vunpack.c.l.b16 %v356
      %v371 = vpack.c.b16 %v362, %v362
      %v372 = vpack.c.b16 %v363, %v363
      %v373 = vpack.c.b16 %v364, %v364
      %v374 = vpack.c.b16 %v365, %v365
      %v375 = vpack.c.b16 %v366, %v366
      %v376 = vpack.c.b16 %v367, %v367
      %v377 = vpack.c.b16 %v368, %v368
      %v378 = vpack.c.b16 %v369, %v369
      %v379 = vpack.c.b16 %v370, %v370
      %vm389 = vcmask 257024
      %390 = vst.msk [vmem:[%s213] sm:$0xf] %vm389, %v371
      %391 = vst.msk [vmem:[%s213 + $0x4] sm:$0xf] %vm389, %v372
      %392 = vst.msk [vmem:[%s213 + $0x8] sm:$0xf] %vm389, %v373
      %393 = vst.msk [vmem:[%s213 + $0xc] sm:$0xf] %vm389, %v374
      %394 = vst.msk [vmem:[%s213 + $0x10] sm:$0xf] %vm389, %v375
      %395 = vst.msk [vmem:[%s213 + $0x14] sm:$0xf] %vm389, %v376
      %396 = vst.msk [vmem:[%s213 + $0x18] sm:$0xf] %vm389, %v377
      %397 = vst.msk [vmem:[%s213 + $0x1c] sm:$0xf] %vm389, %v378
      %vm398 = vcmask 253952
      %399 = vst.msk [vmem:[%s213 + $0x20] sm:$0x1] %vm398, %v379
      %s400 = smul.u32 9, %s18
      %p401 = scmp.lt.s32.totalorder %s20, 2
      %s402 = scalar_select %p401, %s20, 2
      %p403 = scmp.lt.s32.totalorder %s400, 8
      %s404 = scalar_select %p403, %s400, 8
      %p405 = scmp.lt.s32.totalorder %s19, 0
      %s406 = scalar_select %p405, %s19, 0
      %s407 = sadd.s32 %s406, %s404
      %s408 = smul.addr %s402, 9
      %s409 = sadd.s32 %s407, %s408
      %s410 = smul.addr %s409, 4
      %s411 = scalar_lea.vmem %s2, %s410
      // Predicated region
      $region29: #{tpu_custom_call.1} parent=27 // pred_check
        %p412 = pneg %p108
      $region30: #{tpu_custom_call.1} parent=27 // pred_check_branch
        %414 = sbr.rel (%p412) target = $region32
      $region31: #{tpu_custom_call.1} parent=27 // pred_region
        %s415 = smul.u32 9, %s18
      $region32: #{tpu_custom_call.1} parent=27 // pred_fallthru
        _
    $region28: #{tpu_custom_call.1} parent=5 // pred_fallthru
      _
    %p416 = scmp.le.s32.totalorder 2, %s8
    // Predicated region
    $region33: #{tpu_custom_call.1} parent=5 // pred_check
      %p417 = pneg %p416
    $region34: #{tpu_custom_call.1} parent=5 // pred_check_branch
      %419 = sbr.rel (%p417) target = $region36
    $region35: #{tpu_custom_call.1} parent=5 // pred_region
      %s420 = ssub.s32 %s8, 2
      // Predicated region
      $region37: #{tpu_custom_call.1} parent=35 // pred_check
        %p421 = pneg %p114
      $region38: #{tpu_custom_call.1} parent=35 // pred_check_branch
        %423 = sbr.rel (%p421) target = $region40
      $region39: #{tpu_custom_call.1} parent=35 // pred_region
        %s424 = smul.u32 9, %s21
        %p425 = scmp.lt.s32.totalorder %s23, 2
        %s426 = scalar_select %p425, %s23, 2
        %p427 = scmp.lt.s32.totalorder %s424, 8
        %s428 = scalar_select %p427, %s424, 8
        %p429 = scmp.lt.s32.totalorder %s22, 0
        %s430 = scalar_select %p429, %s22, 0
        %s431 = sadd.s32 %s430, %s428
        %s432 = smul.addr %s426, 9
        %s433 = sadd.s32 %s431, %s432
        %s434 = smul.addr %s433, 4
        %s435 = scalar_lea.vmem %s2, %s434
      $region40: #{tpu_custom_call.1} parent=35 // pred_fallthru
        _
    $region36: #{tpu_custom_call.1} parent=5 // pred_fallthru
      _
  $region6: #{tpu_custom_call.1} parent=0 // loop_footer
    %s12 = sadd.s32 1, %s8
  $region7: #{tpu_custom_call.1} parent=0 // loop_footer_branch
    %7 = sbr.rel target = $region3
  $region8: #{tpu_custom_call.1} parent=0 // loop_exit
    _

</llo_original>
